<compile_context>
chip_gen: v5e
topology: v5e:2x2
jax: 0.10.0
libtpu: 0.0.40
codegen_flags: <defaults>
</compile_context>

<pallas_src>
import functools
import math

import jax
import jax.numpy as jnp
from jax import lax
from jax.experimental import pallas as pl
from jax.experimental.pallas import tpu as pltpu

EPS = 1e-6          # SphereSampler epsilon
_PS_EPS = 1e-7      # power_spherical internal epsilon
_LOG2 = math.log(2.0)
_LOGPI = math.log(math.pi)

_LANCZOS_G = 7.0
_LANCZOS_COEF = (
    0.99999999999980993, 676.5203681218851, -1259.1392167224028,
    771.32342877765313, -176.61502916214059, 12.507343278686905,
    -0.13857109526572012, 9.9843695780195716e-6, 1.5056327351493116e-7,
)


def _lgamma(x):
  """Lanczos log-gamma, valid for x > 0.5 (always true here). Elementwise only."""
  z = x - 1.0
  acc = jnp.full_like(z, _LANCZOS_COEF[0])
  for i in range(1, len(_LANCZOS_COEF)):
    acc = acc + _LANCZOS_COEF[i] / (z + float(i))
  t = z + _LANCZOS_G + 0.5
  return 0.5 * math.log(2.0 * math.pi) + (z + 0.5) * jnp.log(t) - t + jnp.log(acc)


def _digamma(x):
  """digamma via 6-step recurrence + asymptotic series, x > 0. Elementwise only."""
  res = jnp.zeros_like(x)
  for k in range(6):
    res = res - 1.0 / (x + float(k))
  w = x + 6.0
  iw = 1.0 / w
  iw2 = iw * iw
  res = res + jnp.log(w) - 0.5 * iw \
      - iw2 * (1.0 / 12.0 - iw2 * (1.0 / 120.0 - iw2 * (1.0 / 252.0)))
  return res


def _prep_kernel(x_ref, ke_ref, *, dim):
  """Packed (kappa, entropy) for a lane-slab of rows.

  x_ref : (dim+1, T)  feature-major raw inputs (rows = features, lanes = rows)
  ke_ref: (2, T)      row 0 = concentration, row 1 = PowerSpherical entropy
  """
  D = dim
  raw = x_ref[pl.ds(D, 1), :]                               # (1, T) last feature

  # concentration = 1 + EPS + softplus(raw)   (torch threshold=20, log1p form)
  sp = jnp.maximum(raw, 0.0) + jnp.log1p(jnp.exp(-jnp.abs(raw)))
  sp = jnp.where(raw > 20.0, raw, sp)
  kappa = 1.0 + EPS + sp

  beta_p = (D - 1) / 2.0
  alpha = beta_p + kappa
  two_bp = D - 1

  if two_bp == 0:
    lg_diff = jnp.zeros_like(alpha)
    dg_diff = jnp.zeros_like(alpha)
  elif two_bp % 2 == 0:
    # Integer beta_p (odd D): exact closed forms — no Lanczos/lgamma needed.
    #   lgamma(a) - lgamma(a+m)   = -log(a (a+1) ... (a+m-1))
    #   digamma(a) - digamma(a+m) = -(1/a + 1/(a+1) + ... + 1/(a+m-1))
    m = two_bp // 2
    prod = alpha
    dg_diff = -1.0 / alpha
    for j in range(1, m):
      prod = prod * (alpha + float(j))
      dg_diff = dg_diff - 1.0 / (alpha + float(j))
    lg_diff = -jnp.log(prod)
  else:
    # Half-integer beta_p (even D): Lanczos fallback.
    lg_diff = _lgamma(alpha) - _lgamma(alpha + beta_p)
    dg_diff = _digamma(alpha) - _digamma(alpha + beta_p)

  ent = ((alpha + beta_p) * _LOG2 + lg_diff + beta_p * _LOGPI
         - kappa * (_LOG2 + dg_diff))

  ke_ref[pl.ds(0, 1), :] = kappa
  ke_ref[pl.ds(1, 1), :] = ent


def _sample_kernel(x_ref, z_ref, v_ref, out_ref, *, dim):
  """PowerSpherical rsample (T-transform + Householder), feature-major layout.

  x_ref  : (dim+1, T) raw inputs (mean direction recomputed here, no HBM round-trip)
  z_ref  : (1, T)     z ~ Beta((D-1)/2 + kappa, (D-1)/2)
  v_ref  : (dim, T)   i.i.d. N(0,1); row 0 is discarded randomness (no JAX-side pad)
  out_ref: (dim, T)
  """
  D = dim
  xm = x_ref[pl.ds(0, D), :]                                # (D, T) mean features
  z = z_ref[...]                                            # (1, T)
  v = v_ref[...]                                            # (D, T)

  row = lax.broadcasted_iota(jnp.int32, xm.shape, 0)
  is0 = row == 0

  # mean = x / ||x||  (rsqrt; tiny floor only guards padded all-zero columns)
  ssm = jnp.sum(xm * xm, axis=0, keepdims=True)
  mu = xm * lax.rsqrt(jnp.maximum(ssm, 1e-30))

  # y = [t, sqrt(max(1 - t^2, eps)) * v / ||v||],  v = rows 1..D-1
  t = 2.0 * z - 1.0                                         # (1, T)
  vm = jnp.where(is0, 0.0, v)
  ssv = jnp.sum(vm * vm, axis=0, keepdims=True)
  v_norm = vm * lax.rsqrt(jnp.maximum(ssv, 1e-30))
  s = jnp.sqrt(jnp.maximum(1.0 - t * t, _PS_EPS))
  y = jnp.where(is0, t, s * v_norm)                         # (D, T)

  # Householder reflection mapping e1 -> mean:  x = y - 2 (u.y) u
  u = jnp.where(is0, 1.0 - mu, -mu)                         # e1 - mu
  un = jnp.sqrt(jnp.sum(u * u, axis=0, keepdims=True))
  u = u * pl.reciprocal(un + _PS_EPS, approx=False)
  d = jnp.sum(u * y, axis=0, keepdims=True)
  out_ref[...] = y - 2.0 * d * u


def _round_up(n, m):
  return pl.cdiv(n, m) * m


def sphere_sampler_forward(inputs, key, *, count, dimension, max_lane_tile=8192):
  """JAX/Pallas equivalent of SphereSampler(count, dimension).forward(inputs)."""
  assert inputs.ndim == 2, "Invalid inputs"
  B = inputs.shape[0]
  D, C = dimension, count
  N = B * C

  # Feature-major, lane-dense layout: (D+1, N_pad) with rows=features, lanes=B*C.
  # Wrapper-side transpose/pad is layout plumbing only.
  x = inputs.reshape(N, D + 1).astype(jnp.float32).T        # (D+1, N)
  lane_tile = min(_round_up(N, 128), max_lane_tile)
  n_pad = _round_up(N, lane_tile)
  if n_pad != N:
    x = jnp.pad(x, ((0, 0), (0, n_pad - N)))
  grid = (n_pad // lane_tile,)
  # NOTE: at production sizes re-derive lane_tile against v7x's 32 MiB scoped VMEM
  # and set pltpu.CompilerParams(vmem_limit_bytes=...); current tiles are << 2 MiB.
  cp = pltpu.CompilerParams(dimension_semantics=("parallel",))

  # Kernel 1: packed (kappa, entropy) — one lane-dense output, no mean write-back.
  ke = pl.pallas_call(
      functools.partial(_prep_kernel, dim=D),
      grid=grid,
      in_specs=[pl.BlockSpec((D + 1, lane_tile), lambda j: (0, j))],
      out_specs=pl.BlockSpec((2, lane_tile), lambda j: (0, j)),
      out_shape=jax.ShapeDtypeStruct((2, n_pad), jnp.float32),
      compiler_params=cp,
  )(x)

  kappa_pad = ke[0]                                         # (n_pad,)

  # Base random draws for the reparameterized sample (RNG glue stays in JAX).
  # TODO(synk): Beta base sampling needs rejection loops; drawn with jax.random,
  # so not bit-identical to torch.distributions' RNG stream.
  beta_p = (D - 1) / 2.0
  k_beta, k_norm = jax.random.split(key)
  z = jax.random.beta(k_beta, beta_p + kappa_pad, beta_p).astype(jnp.float32)
  z = z.reshape(1, n_pad)
  v = jax.random.normal(k_norm, (D, n_pad), jnp.float32)    # row 0 unused in-kernel

  # Kernel 2: rsample transform; mean recomputed in-kernel from raw x.
  sample_t = pl.pallas_call(
      functools.partial(_sample_kernel, dim=D),
      grid=grid,
      in_specs=[
          pl.BlockSpec((D + 1, lane_tile), lambda j: (0, j)),
          pl.BlockSpec((1, lane_tile), lambda j: (0, j)),
          pl.BlockSpec((D, lane_tile), lambda j: (0, j)),
      ],
      out_specs=pl.BlockSpec((D, lane_tile), lambda j: (0, j)),
      out_shape=jax.ShapeDtypeStruct((D, n_pad), jnp.float32),
      compiler_params=cp,
  )(x, z, v)

  sample = sample_t[:, :N].T.reshape(B, C, D)
  entropy = ke[1, :N].reshape(B, C)
  return sample, entropy, []


if __name__ == "__main__":
  COUNT = 8
  DIMENSION = 7
  BATCH = 2

  key = jax.random.PRNGKey(0)
  k_in, k_sample = jax.random.split(key)
  inputs = jax.random.normal(k_in, (BATCH, COUNT * (DIMENSION + 1)), jnp.float32)

  samples, entropy, extra = sphere_sampler_forward(
      inputs, k_sample, count=COUNT, dimension=DIMENSION)
  jax.block_until_ready((samples, entropy))

  assert samples.shape == (BATCH, COUNT, DIMENSION)
  assert entropy.shape == (BATCH, COUNT)
  assert extra == []

  # Samples lie on the unit sphere (sanity, not a golden check).
  norms = jnp.linalg.norm(samples, axis=-1)
  assert bool(jnp.all(jnp.abs(norms - 1.0) < 1e-3))

  # Entropy matches a pure-JAX PowerSpherical entropy reference.
  x_ref = inputs.reshape(BATCH, COUNT, DIMENSION + 1)
  kap_ref = 1.0 + EPS + jax.nn.softplus(x_ref[..., DIMENSION])
  b_ref = (DIMENSION - 1) / 2.0
  a_ref = b_ref + kap_ref
  ln_ref = -((a_ref + b_ref) * _LOG2 + jax.scipy.special.gammaln(a_ref)
             - jax.scipy.special.gammaln(a_ref + b_ref) + b_ref * _LOGPI)
  ent_ref = -(ln_ref + kap_ref * (_LOG2 + jax.scipy.special.digamma(a_ref)
                                  - jax.scipy.special.digamma(a_ref + b_ref)))
  assert bool(jnp.allclose(entropy, ent_ref, atol=1e-3, rtol=1e-3))
  assert bool(jnp.all(jnp.isfinite(samples)))

  print("KERNEL_OK")
</pallas_src>

<mosaic_0001>
module attributes {stable_mosaic.version = 11 : i64} {
  func.func @_prep_kernel(%arg0: i32, %arg1: memref<8x128xf32, #tpu.memory_space<vmem>>, %arg2: memref<2x128xf32, #tpu.memory_space<vmem>>) attributes {dimension_semantics = [#tpu.dimension_semantics<parallel>], iteration_bounds = array<i64: 1>, scalar_prefetch = 0 : i64, scratch_operands = 0 : i64, tpu.core_type = #tpu.core_type<tc>, window_params = [{transform_indices = @transform_0, window_bounds = array<i64: 8, 128>}, {transform_indices = @transform_1, window_bounds = array<i64: 2, 128>}]} {
    %c7 = arith.constant 7 : index
    %c0 = arith.constant 0 : index
    %0 = vector.load %arg1[%c7, %c0] : memref<8x128xf32, #tpu.memory_space<vmem>>, vector<1x128xf32>
    %cst = arith.constant 0.000000e+00 : f32
    %1 = vector.broadcast %cst : f32 to vector<1x128xf32>
    %2 = arith.maximumf %0, %1 : vector<1x128xf32>
    %3 = math.absf %0 : vector<1x128xf32>
    %cst_0 = arith.constant 0.000000e+00 : f32
    %4 = vector.broadcast %cst_0 : f32 to vector<1x128xf32>
    %5 = arith.subf %4, %3 : vector<1x128xf32>
    %6 = math.exp %5 : vector<1x128xf32>
    %7 = math.log1p %6 : vector<1x128xf32>
    %8 = arith.addf %2, %7 : vector<1x128xf32>
    %cst_1 = arith.constant 2.000000e+01 : f32
    %9 = vector.broadcast %cst_1 : f32 to vector<1x128xf32>
    %10 = arith.cmpf ogt, %0, %9 : vector<1x128xf32>
    %11 = arith.select %10, %0, %8 : vector<1x128xi1>, vector<1x128xf32>
    %cst_2 = arith.constant 1.00000095 : f32
    %12 = vector.broadcast %cst_2 : f32 to vector<1x128xf32>
    %13 = arith.addf %12, %11 : vector<1x128xf32>
    %cst_3 = arith.constant 3.000000e+00 : f32
    %14 = vector.broadcast %cst_3 : f32 to vector<1x128xf32>
    %15 = arith.addf %14, %13 : vector<1x128xf32>
    %cst_4 = arith.constant -1.000000e+00 : f32
    %16 = vector.broadcast %cst_4 : f32 to vector<1x128xf32>
    %17 = arith.divf %16, %15 : vector<1x128xf32>
    %cst_5 = arith.constant 1.000000e+00 : f32
    %18 = vector.broadcast %cst_5 : f32 to vector<1x128xf32>
    %19 = arith.addf %15, %18 : vector<1x128xf32>
    %20 = arith.mulf %15, %19 : vector<1x128xf32>
    %cst_6 = arith.constant 1.000000e+00 : f32
    %21 = vector.broadcast %cst_6 : f32 to vector<1x128xf32>
    %22 = arith.addf %15, %21 : vector<1x128xf32>
    %cst_7 = arith.constant 1.000000e+00 : f32
    %23 = vector.broadcast %cst_7 : f32 to vector<1x128xf32>
    %24 = arith.divf %23, %22 : vector<1x128xf32>
    %25 = arith.subf %17, %24 : vector<1x128xf32>
    %cst_8 = arith.constant 2.000000e+00 : f32
    %26 = vector.broadcast %cst_8 : f32 to vector<1x128xf32>
    %27 = arith.addf %15, %26 : vector<1x128xf32>
    %28 = arith.mulf %20, %27 : vector<1x128xf32>
    %cst_9 = arith.constant 2.000000e+00 : f32
    %29 = vector.broadcast %cst_9 : f32 to vector<1x128xf32>
    %30 = arith.addf %15, %29 : vector<1x128xf32>
    %cst_10 = arith.constant 1.000000e+00 : f32
    %31 = vector.broadcast %cst_10 : f32 to vector<1x128xf32>
    %32 = arith.divf %31, %30 : vector<1x128xf32>
    %33 = arith.subf %25, %32 : vector<1x128xf32>
    %34 = math.log %28 : vector<1x128xf32>
    %cst_11 = arith.constant 0.000000e+00 : f32
    %35 = vector.broadcast %cst_11 : f32 to vector<1x128xf32>
    %36 = arith.subf %35, %34 : vector<1x128xf32>
    %cst_12 = arith.constant 3.000000e+00 : f32
    %37 = vector.broadcast %cst_12 : f32 to vector<1x128xf32>
    %38 = arith.addf %15, %37 : vector<1x128xf32>
    %cst_13 = arith.constant 0.693147182 : f32
    %39 = vector.broadcast %cst_13 : f32 to vector<1x128xf32>
    %40 = arith.mulf %38, %39 : vector<1x128xf32>
    %41 = arith.addf %40, %36 : vector<1x128xf32>
    %cst_14 = arith.constant 3.43418956 : f32
    %42 = vector.broadcast %cst_14 : f32 to vector<1x128xf32>
    %43 = arith.addf %41, %42 : vector<1x128xf32>
    %cst_15 = arith.constant 0.693147182 : f32
    %44 = vector.broadcast %cst_15 : f32 to vector<1x128xf32>
    %45 = arith.addf %44, %33 : vector<1x128xf32>
    %46 = arith.mulf %13, %45 : vector<1x128xf32>
    %47 = arith.subf %43, %46 : vector<1x128xf32>
    %c0_16 = arith.constant 0 : index
    %c0_17 = arith.constant 0 : index
    %48 = vector.load %arg2[%c0_16, %c0_17] : memref<2x128xf32, #tpu.memory_space<vmem>>, vector<1x128xf32>
    tpu.vector_store %arg2[%c0_16, %c0_17], %13 {strides = array<i32>} : memref<2x128xf32, #tpu.memory_space<vmem>>, vector<1x128xf32>,
    %c1 = arith.constant 1 : index
    %c0_18 = arith.constant 0 : index
    %49 = vector.load %arg2[%c1, %c0_18] : memref<2x128xf32, #tpu.memory_space<vmem>>, vector<1x128xf32>
    tpu.vector_store %arg2[%c1, %c0_18], %47 {strides = array<i32>} : memref<2x128xf32, #tpu.memory_space<vmem>>, vector<1x128xf32>,
    return
  }
  func.func @transform_0(%arg0: i32) -> (i32, i32) {
    %c0_i32 = arith.constant 0 : i32
    %c0_i32_0 = arith.constant 0 : i32
    return %c0_i32, %arg0 : i32, i32
  }
  func.func @transform_1(%arg0: i32) -> (i32, i32) {
    %c0_i32 = arith.constant 0 : i32
    %c0_i32_0 = arith.constant 0 : i32
    return %c0_i32, %arg0 : i32, i32
  }
}

</mosaic_0001>

<llo_original>
// kernel: tpu_custom_call.1
$region0: #{tpu_custom_call.1}
  #allocation0 [shape = 'u32[]', space=smem, size = 0x4, offset = 0x4, fixed_abs, tag = 'smem constant byte address 0x4 - core index']
  #allocation1 [shape = 'u32[72,128]{1,0:T(1,128)}', space=vmem, size = 0x9000, scoped, tag = 'internal scratch']
  %s0 = inlined_call_operand.hbm [shape: f32[8,128], index: 0, kind: input, shape index: {}]
  %s1 = inlined_call_operand.hbm [shape: f32[2,128], index: 1, kind: output, shape index: {}]
  %s2 = sld [smem:[#allocation0]]
  $region18: #{tpu_custom_call.1} parent=0
    _
  %s4 = ssub.s32 1, %s2
  %s5 = scalar_select 0, %s4, %s2
  $region1: #{tpu_custom_call.1} parent=0
    #allocation2 [shape = 'u8[4096]{0}', space=vmem, size = 0x1000, scoped, tag = 'input window, operand 0, single buffered']
    #allocation3 [shape = 's32[1]{0}', space=sflag, size = 0x4, scoped, tag = 'scoped memory for tpu_custom_call.1']
    #allocation4 [shape = 's32[1]{0}', space=sflag, size = 0x4, scoped, tag = 'scoped memory for tpu_custom_call.1']
    #allocation5 [shape = 'u8[1024]{0}', space=vmem, size = 0x400, scoped, tag = 'output window, operand 0, single buffered']
    %6 = vsyncpa [#allocation3], 0
    %7 = vsyncpa [#allocation4], 0
    // Predicated region
    $region2: #{tpu_custom_call.1} parent=1 // pred_check
      _
    $region3: #{tpu_custom_call.1} parent=1 // pred_check_branch
      %9 = sbr.rel (0) target = $region5
    $region4: #{tpu_custom_call.1} parent=1 // pred_region
      %11 = vsyncadd [#allocation3], 0
      %s13 = sshll.u32 %s0, 4
      %s14 = int_to_ptr.hbm [resolvable:$true] %s13
      %s15 = sshll.u32 [#allocation2], 4
      %s16 = int_to_ptr.vmem [resolvable:$true] %s15
      %18 = dma.hbm_to_vmem [thread:$0]  %s14, 128, %s16, [#allocation3]
    $region5: #{tpu_custom_call.1} parent=1 // pred_fallthru
      _
    // Predicated region
    $region6: #{tpu_custom_call.1} parent=1 // pred_check
      _
    $region7: #{tpu_custom_call.1} parent=1 // pred_check_branch
      %20 = sbr.rel (0) target = $region9
    $region8: #{tpu_custom_call.1} parent=1 // pred_region
      %22 = dma.done [#allocation3], 128
    $region9: #{tpu_custom_call.1} parent=1 // pred_fallthru
      _
    %v23 = vld [vmem:[#allocation2 + $0x7] sm:$0x1]
    %v24 = vmax.f32 %v23, 0.0
    %v25 = vand.u32 2147483647, %v23
    %v26 = vsub.f32 0.0, %v25
    %v27 = vmul.f32 %v26, 1.442695
    %v28 = vpow.pop %v27
    %v29 = vadd.f32 %v28, 1.0
    %v30 = vlog2.pop %v29
    %v31 = vmul.f32 %v30, 0.6931472
    %v32 = vmul.f32 -0.5, %v28
    %v33 = vadd.f32 %v32, 1.0
    %v34 = vmul.f32 %v33, %v28
    %v35 = vand.u32 2147483647, %v28
    %vm36 = vcmp.lt.f32.partialorder %v35, 0.0004427343
    %v37 = vsel %vm36, %v34, %v31
    %v38 = vadd.f32 %v24, %v37
    %vm39 = vcmp.gt.f32.partialorder %v23, 20.0
    %v40 = vsel %vm39, %v23, %v38
    %v41 = vadd.f32 %v40, 1.000001
    %v42 = vadd.f32 %v41, 3.0
    %v43 = vrcp.pop %v42
    %v44 = vmul.f32 %v42, %v43
    %v45 = vsub.f32 1.0, %v44
    %v46 = vmul.f32 %v43, %v45
    %v47 = vadd.f32 %v43, %v46
    %vm48 = vweird.f32 %v42
    %vm49 = vweird.f32 %v43
    %vm50 = vmor %vm48, %vm49
    %v51 = vsel %vm50, %v43, %v47
    %v52 = vand.u32 2147483647, %v42
    %vm53 = vcmp.eq.f32.partialorder %v52, 8.507059e+37
    %v54 = vand.u32 %v42, 2147483648
    %v55 = vor.u32 1.1754944e-38, %v54
    %v56 = vsel %vm53, %v55, %v51
    %v57 = vmul.f32 -1.0, %v56
    %v58 = vadd.f32 %v42, 1.0
    %v59 = vmul.f32 %v42, %v58
    %v60 = vrcp.pop %v58
    %v61 = vmul.f32 %v58, %v60
    %v62 = vsub.f32 1.0, %v61
    %v63 = vmul.f32 %v60, %v62
    %v64 = vadd.f32 %v60, %v63
    %vm65 = vweird.f32 %v58
    %vm66 = vweird.f32 %v60
    %vm67 = vmor %vm65, %vm66
    %v68 = vsel %vm67, %v60, %v64
    %v69 = vand.u32 2147483647, %v58
    %vm70 = vcmp.eq.f32.partialorder %v69, 8.507059e+37
    %v71 = vand.u32 %v58, 2147483648
    %v72 = vor.u32 1.1754944e-38, %v71
    %v73 = vsel %vm70, %v72, %v68
    %v74 = vmul.f32 1.0, %v73
    %v75 = vsub.f32 %v57, %v74
    %v76 = vadd.f32 %v42, 2.0
    %v77 = vmul.f32 %v59, %v76
    %v78 = vrcp.pop %v76
    %v79 = vmul.f32 %v76, %v78
    %v80 = vsub.f32 1.0, %v79
    %v81 = vmul.f32 %v78, %v80
    %v82 = vadd.f32 %v78, %v81
    %vm83 = vweird.f32 %v76
    %vm84 = vweird.f32 %v78
    %vm85 = vmor %vm83, %vm84
    %v86 = vsel %vm85, %v78, %v82
    %v87 = vand.u32 2147483647, %v76
    %vm88 = vcmp.eq.f32.partialorder %v87, 8.507059e+37
    %v89 = vand.u32 %v76, 2147483648
    %v90 = vor.u32 1.1754944e-38, %v89
    %v91 = vsel %vm88, %v90, %v86
    %v92 = vmul.f32 1.0, %v91
    %v93 = vsub.f32 %v75, %v92
    %v94 = vlog2.pop %v77
    %v95 = vmul.f32 %v94, 0.6931472
    %v96 = vsub.f32 0.0, %v95
    %v97 = vadd.f32 %v42, 3.0
    %v98 = vmul.f32 %v97, 0.6931472
    %v99 = vadd.f32 %v98, %v96
    %v100 = vadd.f32 %v99, 3.4341896
    %v101 = vadd.f32 %v93, 0.6931472
    %v102 = vmul.f32 %v41, %v101
    %v103 = vsub.f32 %v100, %v102
    %104 = vst [vmem:[#allocation5] sm:$0x1] %v41
    %105 = vst [vmem:[#allocation5 + $0x1] sm:$0x1] %v103
    // Predicated region
    $region10: #{tpu_custom_call.1} parent=1 // pred_check
      _
    $region11: #{tpu_custom_call.1} parent=1 // pred_check_branch
      %107 = sbr.rel (0) target = $region13
    $region12: #{tpu_custom_call.1} parent=1 // pred_region
      %109 = vsyncadd [#allocation4], 0
      %s111 = sshll.u32 [#allocation5], 4
      %s112 = int_to_ptr.vmem [resolvable:$true] %s111
      %s113 = sshll.u32 %s1, 4
      %s114 = int_to_ptr.hbm [resolvable:$true] %s113
      %116 = dma.vmem_to_hbm [thread:$0]  %s112, 32, %s114, [#allocation4]
    $region13: #{tpu_custom_call.1} parent=1 // pred_fallthru
      _
    // Predicated region
    $region14: #{tpu_custom_call.1} parent=1 // pred_check
      _
    $region15: #{tpu_custom_call.1} parent=1 // pred_check_branch
      %118 = sbr.rel (0) target = $region17
    $region16: #{tpu_custom_call.1} parent=1 // pred_region
      %120 = dma.done [#allocation4], 32
    $region17: #{tpu_custom_call.1} parent=1 // pred_fallthru
      _
    %121 = vsyncpa [#allocation3], 1
    %122 = vsyncpa [#allocation4], 1

</llo_original>
